<compile_context>
chip_gen: v7x
topology: tpu7x:2x2x1
jax: 0.10.0
libtpu: 0.0.40
codegen_flags: <defaults>
</compile_context>

<pallas_src>
import functools

import jax
import jax.numpy as jnp
from jax.experimental import pallas as pl
from jax.experimental.pallas import tpu as pltpu

_MIB = 1024 * 1024


def _round_up(x, m):
    return ((x + m - 1) // m) * m


def _sublane_pack(dtype):
    # f32 -> 8, bf16 -> 16, int8/fp8 -> 32
    return max(8, 8 * (4 // max(1, jnp.dtype(dtype).itemsize)))


def _tpu_vmem_capacity_bytes():
    try:
        return int(pltpu.get_tpu_info().vmem_capacity_bytes)
    except Exception:
        return 64 * _MIB  # conservative (v7x per-TC VMEM)


def _working_set_bytes(tm, tn, H, x_sz, w_sz, o_sz, use_acc):
    """Rough double-buffered VMEM footprint for one grid step."""
    ws = 2 * tm * H * x_sz            # x block (double-buffered)
    ws += 2 * H * (2 * tn) * w_sz     # fused [gate_j|up_j] weight block
    ws += 2 * tn * H * w_sz           # down-projection weight block
    ws += 2 * tm * H * o_sz           # output block
    if use_acc:
        ws += tm * H * 4              # f32 accumulator scratch
    ws += 2 * tm * (2 * tn) * 4       # gu + hidden f32 temporaries (rough)
    return ws


def _auto_config(M, H, I, x_dtype, w_dtype, tile_m, tile_n, vmem_limit_bytes):
    """Pick (tile_m, tile_n, vmem_limit, use_acc_scratch) for this chip/problem."""
    cap = _tpu_vmem_capacity_bytes()
    big_vmem = cap >= 100 * _MIB           # v5e / v6e (128 MiB); v7x has 64 MiB
    if vmem_limit_bytes is None:
        # Leave headroom for Mosaic internal scratch (never the full physical VMEM).
        vmem_limit_bytes = (100 if big_vmem else 56) * _MIB

    x_sz = jnp.dtype(x_dtype).itemsize
    w_sz = jnp.dtype(w_dtype).itemsize
    o_sz = x_sz
    use_acc = jnp.dtype(x_dtype) != jnp.dtype(jnp.float32)
    pack = _sublane_pack(x_dtype)

    if tile_n is None:
        tile_n = 256 if (big_vmem or H <= 4096) else 128
    if tile_m is None:
        # Intensity vs streamed weights ~= tile_m FLOPs/byte; target the MXU roofline.
        tile_m = 1024 if big_vmem else 512

    # Clamp to (padded) problem size + lane/sublane alignment.
    tn = max(128, min(_round_up(tile_n, 128), _round_up(I, 128)))
    tm = max(pack, min(_round_up(tile_m, pack), _round_up(M, pack)))

    # Shrink to fit the VMEM budget: tn first (keep >=128), then tm.
    while (_working_set_bytes(tm, tn, H, x_sz, w_sz, o_sz, use_acc)
           > vmem_limit_bytes and tn > 128):
        tn = max(128, _round_up(tn // 2, 128))
    while (_working_set_bytes(tm, tn, H, x_sz, w_sz, o_sz, use_acc)
           > vmem_limit_bytes and tm > pack):
        tm = max(pack, _round_up(tm // 2, pack))

    return tm, tn, vmem_limit_bytes, use_acc


def fuse_mlp_weights(w_gate, w_up, w_down, tile_n):
    """One-time weight prep (do at weight-load time, NOT per forward call).

    Pads the intermediate dim to a multiple of tile_n and interleaves gate/up
    per I-tile so each grid step reads one contiguous, lane-dense
    [gate_j | up_j] block -> a single MXU matmul per step.
    """
    H, I = w_gate.shape
    Ip = _round_up(I, tile_n)
    if Ip != I:
        pad = Ip - I
        w_gate = jnp.pad(w_gate, ((0, 0), (0, pad)))
        w_up = jnp.pad(w_up, ((0, 0), (0, pad)))
        w_down = jnp.pad(w_down, ((0, pad), (0, 0)))
    n_n = Ip // tile_n
    w_gu = jnp.concatenate(
        [w_gate.reshape(H, n_n, tile_n), w_up.reshape(H, n_n, tile_n)],
        axis=2).reshape(H, 2 * Ip)
    return w_gu, w_down


def _mlp_kernel_acc(x_ref, wgu_ref, wd_ref, o_ref, acc_ref):
    """Non-f32 outputs: accumulate in a resident f32 scratch, cast on last I-tile."""
    j = pl.program_id(1)

    @pl.when(j == 0)
    def _():
        acc_ref[...] = jnp.zeros_like(acc_ref)

    tn = wd_ref.shape[0]  # static
    gu = jnp.dot(x_ref[...], wgu_ref[...],
                 preferred_element_type=jnp.float32)          # [tm, 2*tn]
    gate = gu[:, :tn]
    up = gu[:, tn:]
    hidden = (gate * jax.nn.sigmoid(gate)) * up                # SiLU in f32
    acc_ref[...] += jnp.dot(hidden.astype(wd_ref.dtype), wd_ref[...],
                            preferred_element_type=jnp.float32)

    @pl.when(j == pl.num_programs(1) - 1)
    def _():
        o_ref[...] = acc_ref[...].astype(o_ref.dtype)


def _mlp_kernel_f32out(x_ref, wgu_ref, wd_ref, o_ref):
    """f32 outputs: accumulate directly into the resident output block (no scratch)."""
    j = pl.program_id(1)

    @pl.when(j == 0)
    def _():
        o_ref[...] = jnp.zeros_like(o_ref)

    tn = wd_ref.shape[0]  # static
    gu = jnp.dot(x_ref[...], wgu_ref[...],
                 preferred_element_type=jnp.float32)          # [tm, 2*tn]
    gate = gu[:, :tn]
    up = gu[:, tn:]
    hidden = (gate * jax.nn.sigmoid(gate)) * up                # SiLU in f32
    o_ref[...] += jnp.dot(hidden.astype(wd_ref.dtype), wd_ref[...],
                          preferred_element_type=jnp.float32)


@functools.partial(
    jax.jit,
    static_argnames=("tile_m", "tile_n", "vmem_limit_bytes", "use_acc_scratch",
                     "wgu_buffers"))
def mlp_pallas_fused(x, w_gu, w_down, *, tile_m, tile_n, vmem_limit_bytes,
                     use_acc_scratch, wgu_buffers=2):
    """x: [B,S,H]; w_gu: [H, 2*Ip] (from fuse_mlp_weights); w_down: [Ip,H]."""
    B, S, H = x.shape
    Ip = w_gu.shape[1] // 2
    assert w_gu.shape == (H, 2 * Ip) and w_down.shape == (Ip, H)
    assert Ip % tile_n == 0
    # Production contract: H (output lane width) should be a multiple of 128
    # for unmasked lane-dense stores; toy shapes (< 128) still lower correctly.

    M = B * S
    tm, tn = tile_m, tile_n
    n_m = pl.cdiv(M, tm)
    n_n = Ip // tn
    Mp = n_m * tm

    x2d = x.reshape(M, H)
    if Mp != M:
        # Pad rows: keeps stores sublane-dense; padded rows compute harmless zeros.
        x2d = jnp.pad(x2d, ((0, Mp - M), (0, 0)))

    x_sz = jnp.dtype(x.dtype).itemsize
    w_sz = jnp.dtype(w_gu.dtype).itemsize
    cost = pl.CostEstimate(
        flops=6 * Mp * H * Ip,                     # 2*M*H*(2I) + 2*M*I*H
        transcendentals=Mp * Ip,                   # sigmoid per gate element
        bytes_accessed=(Mp * H * x_sz              # x in
                        + Mp * H * x_sz            # out
                        + n_m * (2 * H * Ip + Ip * H) * w_sz),  # weights re-streamed n_m times
    )

    wgu_kwargs = {}
    if wgu_buffers != 2 and hasattr(pl, "Buffered"):
        wgu_kwargs["pipeline_mode"] = pl.Buffered(wgu_buffers)

    in_specs = [
        pl.BlockSpec((tm, H), lambda i, j: (i, 0)),               # x rows (j-invariant)
        pl.BlockSpec((H, 2 * tn), lambda i, j: (0, j), **wgu_kwargs),  # fused [gate_j|up_j]
        pl.BlockSpec((tn, H), lambda i, j: (j, 0)),               # down-proj tile
    ]
    out_spec = pl.BlockSpec((tm, H), lambda i, j: (i, 0))          # resident over j

    if use_acc_scratch:
        kernel = _mlp_kernel_acc
        scratch = [pltpu.VMEM((tm, H), jnp.float32)]
    else:
        kernel = _mlp_kernel_f32out
        scratch = []

    out2d = pl.pallas_call(
        kernel,
        out_shape=jax.ShapeDtypeStruct((Mp, H), x.dtype),
        grid_spec=pltpu.PrefetchScalarGridSpec(
            num_scalar_prefetch=0,
            grid=(n_m, n_n),
            in_specs=in_specs,
            out_specs=out_spec,
            scratch_shapes=scratch,
        ),
        compiler_params=pltpu.CompilerParams(
            dimension_semantics=("parallel", "arbitrary"),
            vmem_limit_bytes=vmem_limit_bytes),
        cost_estimate=cost,
    )(x2d, w_gu, w_down)

    if Mp != M:
        out2d = out2d[:M]
    return out2d.reshape(B, S, H)


def mlp_pallas(x, w_gate, w_up, w_down, *, tile_m=None, tile_n=None,
               vmem_limit_bytes=None, wgu_buffers=2):
    """x: [B,S,H]; w_gate/w_up: [H,I]; w_down: [I,H] -> [B,S,H].

    Convenience wrapper: fuses weights inline every call.  For production,
    call `fuse_mlp_weights` once at load time and use `mlp_pallas_fused`
    directly (saves a full 2*H*I weight pass through HBM per invocation).
    """
    B, S, H = x.shape
    Hg, I = w_gate.shape
    assert Hg == H and w_up.shape == (H, I) and w_down.shape == (I, H)
    tm, tn, vlim, use_acc = _auto_config(
        B * S, H, I, x.dtype, w_gate.dtype, tile_m, tile_n, vmem_limit_bytes)
    w_gu, w_down_p = fuse_mlp_weights(w_gate, w_up, w_down, tn)
    return mlp_pallas_fused(x, w_gu, w_down_p, tile_m=tm, tile_n=tn,
                            vmem_limit_bytes=vlim, use_acc_scratch=use_acc,
                            wgu_buffers=wgu_buffers)


def mlp_reference(x, w_gate, w_up, w_down):
    g = x @ w_gate
    u = x @ w_up
    return (jax.nn.silu(g) * u) @ w_down


if __name__ == "__main__":
    # Small config consistent with the module: hidden_size=32, intermediate_size=64.
    batch, seq, hidden, intermediate = 2, 8, 32, 64

    key = jax.random.PRNGKey(0)
    kx, kg, ku, kd = jax.random.split(key, 4)

    x = jax.random.normal(kx, (batch, seq, hidden), dtype=jnp.float32)
    # Linear layers have bias=False; weights stored as [in, out]
    # (transpose of torch's nn.Linear weight [out, in]).
    w_gate = jax.random.normal(kg, (hidden, intermediate), dtype=jnp.float32) * 0.05
    w_up = jax.random.normal(ku, (hidden, intermediate), dtype=jnp.float32) * 0.05
    w_down = jax.random.normal(kd, (intermediate, hidden), dtype=jnp.float32) * 0.05

    out = jax.block_until_ready(mlp_pallas(x, w_gate, w_up, w_down))
    ref = mlp_reference(x, w_gate, w_up, w_down)
    assert out.shape == (batch, seq, hidden)
    assert jnp.allclose(out, ref, atol=1e-4, rtol=1e-4), "mismatch vs reference"

    # Ragged-M path: B*S = 21 is not a multiple of the row tile; exercises
    # the row padding / slice-back logic.
    x2 = jax.random.normal(jax.random.PRNGKey(1), (3, 7, hidden), dtype=jnp.float32)
    out2 = jax.block_until_ready(mlp_pallas(x2, w_gate, w_up, w_down))
    ref2 = mlp_reference(x2, w_gate, w_up, w_down)
    assert out2.shape == (3, 7, hidden)
    assert jnp.allclose(out2, ref2, atol=1e-4, rtol=1e-4), "ragged-M mismatch"

    # bf16 path: exercises the f32-accumulator kernel and the production
    # entry point (pre-fused weights, fused once, called directly).
    xb = x.astype(jnp.bfloat16)
    wgb = w_gate.astype(jnp.bfloat16)
    wub = w_up.astype(jnp.bfloat16)
    wdb = w_down.astype(jnp.bfloat16)
    tm, tn, vlim, use_acc = _auto_config(batch * seq, hidden, intermediate,
                                         xb.dtype, wgb.dtype, None, None, None)
    w_gu_b, w_down_b = fuse_mlp_weights(wgb, wub, wdb, tn)
    out3 = jax.block_until_ready(
        mlp_pallas_fused(xb, w_gu_b, w_down_b, tile_m=tm, tile_n=tn,
                         vmem_limit_bytes=vlim, use_acc_scratch=use_acc))
    ref3 = mlp_reference(xb.astype(jnp.float32), wgb.astype(jnp.float32),
                         wub.astype(jnp.float32), wdb.astype(jnp.float32))
    assert out3.shape == (batch, seq, hidden)
    assert jnp.allclose(out3.astype(jnp.float32), ref3, atol=2e-2, rtol=2e-2), \
        "bf16 mismatch vs reference"

    print("KERNEL_OK")
</pallas_src>

<mosaic_0001>
module attributes {stable_mosaic.version = 11 : i64} {
  func.func @_mlp_kernel_f32out(%arg0: i32, %arg1: i32, %arg2: memref<16x32xf32, #tpu.memory_space<vmem>>, %arg3: memref<32x256xf32, #tpu.memory_space<vmem>>, %arg4: memref<128x32xf32, #tpu.memory_space<vmem>>, %arg5: memref<16x32xf32, #tpu.memory_space<vmem>>) attributes {dimension_semantics = [#tpu.dimension_semantics<parallel>, #tpu.dimension_semantics<arbitrary>], iteration_bounds = array<i64: 1, 1>, scalar_prefetch = 0 : i64, scratch_operands = 0 : i64, tpu.core_type = #tpu.core_type<tc>, window_params = [{transform_indices = @transform_0, window_bounds = array<i64: 16, 32>}, {transform_indices = @transform_1, window_bounds = array<i64: 32, 256>}, {transform_indices = @transform_2, window_bounds = array<i64: 128, 32>}, {transform_indices = @transform_3, window_bounds = array<i64: 16, 32>}]} {
    %c0_i32 = arith.constant 0 : i32
    %0 = arith.cmpi eq, %arg1, %c0_i32 : i32
    %1 = arith.extui %0 : i1 to i32
    %c0_i32_0 = arith.constant 0 : i32
    %2 = arith.cmpi ne, %1, %c0_i32_0 : i32
    scf.if %2 {
      %cst_12 = arith.constant 0.000000e+00 : f32
      %20 = vector.broadcast %cst_12 : f32 to vector<16x32xf32>
      %c0_13 = arith.constant 0 : index
      %c0_14 = arith.constant 0 : index
      %21 = vector.load %arg5[%c0_13, %c0_14] : memref<16x32xf32, #tpu.memory_space<vmem>>, vector<16x32xf32>
      tpu.vector_store %arg5[%c0_13, %c0_14], %20 {strides = array<i32>} : memref<16x32xf32, #tpu.memory_space<vmem>>, vector<16x32xf32>,
    } else {
    }
    %c0 = arith.constant 0 : index
    %c0_1 = arith.constant 0 : index
    %3 = vector.load %arg2[%c0, %c0_1] : memref<16x32xf32, #tpu.memory_space<vmem>>, vector<16x32xf32>
    %c0_2 = arith.constant 0 : index
    %c0_3 = arith.constant 0 : index
    %4 = vector.load %arg3[%c0_2, %c0_3] : memref<32x256xf32, #tpu.memory_space<vmem>>, vector<32x256xf32>
    %cst = arith.constant dense<0.000000e+00> : vector<16x256xf32>
    %5 = tpu.matmul %3, %4, %cst {dimension_numbers = #tpu.dot_dimension_numbers<[1], [0], [0], [1], [0, 0, 1, 1], [], []>} : vector<16x32xf32>, vector<32x256xf32>, vector<16x256xf32> -> vector<16x256xf32>
    %6 = vector.extract_strided_slice %5 {offsets = [0, 0], sizes = [16, 128], strides = [1, 1]} : vector<16x256xf32> to vector<16x128xf32>
    %7 = vector.extract_strided_slice %5 {offsets = [0, 128], sizes = [16, 128], strides = [1, 1]} : vector<16x256xf32> to vector<16x128xf32>
    %8 = arith.negf %6 : vector<16x128xf32>
    %9 = math.exp %8 : vector<16x128xf32>
    %cst_4 = arith.constant 1.000000e+00 : f32
    %10 = vector.broadcast %cst_4 : f32 to vector<16x128xf32>
    %11 = arith.addf %10, %9 : vector<16x128xf32>
    %12 = arith.divf %10, %11 : vector<16x128xf32>
    %13 = arith.mulf %6, %12 : vector<16x128xf32>
    %14 = arith.mulf %13, %7 : vector<16x128xf32>
    %c0_5 = arith.constant 0 : index
    %c0_6 = arith.constant 0 : index
    %15 = vector.load %arg5[%c0_5, %c0_6] : memref<16x32xf32, #tpu.memory_space<vmem>>, vector<16x32xf32>
    %c0_7 = arith.constant 0 : index
    %c0_8 = arith.constant 0 : index
    %16 = vector.load %arg4[%c0_7, %c0_8] : memref<128x32xf32, #tpu.memory_space<vmem>>, vector<128x32xf32>
    %cst_9 = arith.constant dense<0.000000e+00> : vector<16x32xf32>
    %17 = tpu.matmul %14, %16, %cst_9 {dimension_numbers = #tpu.dot_dimension_numbers<[1], [0], [0], [1], [0, 0, 1, 1], [], []>} : vector<16x128xf32>, vector<128x32xf32>, vector<16x32xf32> -> vector<16x32xf32>
    %18 = arith.addf %15, %17 : vector<16x32xf32>
    %c0_10 = arith.constant 0 : index
    %c0_11 = arith.constant 0 : index
    %19 = vector.load %arg5[%c0_10, %c0_11] : memref<16x32xf32, #tpu.memory_space<vmem>>, vector<16x32xf32>
    tpu.vector_store %arg5[%c0_10, %c0_11], %18 {strides = array<i32>} : memref<16x32xf32, #tpu.memory_space<vmem>>, vector<16x32xf32>,
    return
  }
  func.func @transform_0(%arg0: i32, %arg1: i32) -> (i32, i32) {
    %c0_i32 = arith.constant 0 : i32
    %c0_i32_0 = arith.constant 0 : i32
    return %arg0, %c0_i32 : i32, i32
  }
  func.func @transform_1(%arg0: i32, %arg1: i32) -> (i32, i32) {
    %c0_i32 = arith.constant 0 : i32
    %c0_i32_0 = arith.constant 0 : i32
    return %c0_i32, %arg1 : i32, i32
  }
  func.func @transform_2(%arg0: i32, %arg1: i32) -> (i32, i32) {
    %c0_i32 = arith.constant 0 : i32
    %c0_i32_0 = arith.constant 0 : i32
    return %arg1, %c0_i32 : i32, i32
  }
  func.func @transform_3(%arg0: i32, %arg1: i32) -> (i32, i32) {
    %c0_i32 = arith.constant 0 : i32
    %c0_i32_0 = arith.constant 0 : i32
    return %arg0, %c0_i32 : i32, i32
  }
}

</mosaic_0001>

<llo_original>
// kernel: mlp_pallas_fused.1
$region0: #{mlp_pallas_fused.1}
  #allocation0 [shape = 'u32[]', space=smem, size = 0x4, offset = 0x4, fixed_abs, tag = 'smem constant byte address 0x4 - core index']
  #allocation1 [shape = 'u32[144,128]{1,0:T(1,128)}', space=vmem, size = 0x12000, scoped, tag = 'internal scratch']
  %s0 = inlined_call_operand.vmem [shape: f32[16,32], index: 0, kind: input, shape index: {}]
  %s1 = inlined_call_operand.vmem [shape: f32[32,256], index: 1, kind: input, shape index: {}]
  %s2 = inlined_call_operand.vmem [shape: f32[128,32], index: 2, kind: input, shape index: {}]
  %s3 = inlined_call_operand.hbm [shape: f32[16,32], index: 3, kind: output, shape index: {}]
  %s4 = sld [smem:[#allocation0]]
  $region26: #{mlp_pallas_fused.1} parent=0
    _
  %s6 = ssub.s32 1, %s4
  %s7 = scalar_select 0, %s6, %s4
  $region1: #{mlp_pallas_fused.1} parent=0
    #allocation2 [shape = 'u8[8192]{0}', space=vmem, size = 0x2000, scoped, tag = 'output window, operand 0, single buffered']
    #allocation3 [shape = 's32[1]{0}', space=sflag, size = 0x4, scoped, tag = 'scoped memory for mlp_pallas_fused.1']
    %8 = vsyncpa [#allocation3], 0
    // Predicated region
    $region2: #{mlp_pallas_fused.1} parent=1 // pred_check
      _
    $region3: #{mlp_pallas_fused.1} parent=1 // pred_check_branch
      %10 = sbr.rel (0) target = $region5
    $region4: #{mlp_pallas_fused.1} parent=1 // pred_region
      _
    $region5: #{mlp_pallas_fused.1} parent=1 // pred_fallthru
      _
    // Predicated region
    $region6: #{mlp_pallas_fused.1} parent=1 // pred_check
      _
    $region7: #{mlp_pallas_fused.1} parent=1 // pred_check_branch
      %12 = sbr.rel (0) target = $region9
    $region8: #{mlp_pallas_fused.1} parent=1 // pred_region
      _
    $region9: #{mlp_pallas_fused.1} parent=1 // pred_fallthru
      _
    // Predicated region
    $region10: #{mlp_pallas_fused.1} parent=1 // pred_check
      _
    $region11: #{mlp_pallas_fused.1} parent=1 // pred_check_branch
      %14 = sbr.rel (0) target = $region13
    $region12: #{mlp_pallas_fused.1} parent=1 // pred_region
      _
    $region13: #{mlp_pallas_fused.1} parent=1 // pred_fallthru
      _
    %p15 = scmp.eq.s32.totalorder 0, 0
    // Predicated region
    $region14: #{mlp_pallas_fused.1} parent=1 // pred_check
      %p16 = pneg %p15
    $region15: #{mlp_pallas_fused.1} parent=1 // pred_check_branch
      %18 = sbr.rel (%p16) target = $region17
    $region16: #{mlp_pallas_fused.1} parent=1 // pred_region
      %vm19 = vcmask 261120
      %20 = vst.msk [vmem:[#allocation2] sm:$0xff] %vm19, 0.0
      %21 = vst.msk [vmem:[#allocation2 + $0x8] sm:$0xff] %vm19, 0.0
    $region17: #{mlp_pallas_fused.1} parent=1 // pred_fallthru
      _
    %v22 = vld [vmem:[%s0] sm:$0xff]
    %v23 = vld [vmem:[%s0 + $0x8] sm:$0xff]
    %v24 = vld [vmem:[%s1] sm:$0xff]
    %v25 = vld [vmem:[%s1 + $0x8] sm:$0xff]
    %v26 = vld [vmem:[%s1 + $0x10] sm:$0xff]
    %v27 = vld [vmem:[%s1 + $0x18] sm:$0xff]
    %v28 = vld [vmem:[%s1 + $0x20] sm:$0xff]
    %v29 = vld [vmem:[%s1 + $0x28] sm:$0xff]
    %v30 = vld [vmem:[%s1 + $0x30] sm:$0xff]
    %v31 = vld [vmem:[%s1 + $0x38] sm:$0xff]
    %vm32 = vcmask 261120
    %v34 = vsel %vm32, %v22, 0
    %v37 = vsel %vm32, %v23, 0
    %39 = vmatprep.subr.mxu0 %v25
    %40 = vmatpush1.msra.mxu0 %v24
    %41 = vmatprep.subr.mxu0 %v27
    %42 = vmatpush1.msra.mxu0 %v26
    %43 = vmatprep.subr.mxu0 %v29
    %44 = vmatpush1.msra.mxu0 %v28
    %45 = vmatprep.subr.mxu0 %v31
    %46 = vmatpush1.msra.mxu0 %v30
    %47 = vmatprep.subr.mxu0 0.0
    %48 = vmatpush1.msra.mxu0 0.0
    %49 = vmatprep.subr.mxu0 0.0
    %50 = vmatpush1.msra.mxu0 0.0
    %51 = vmatprep.subr.mxu0 0.0
    %52 = vmatpush1.msra.mxu0 0.0
    %53 = vmatprep.subr.mxu0 0.0
    %54 = vmatpush1.msra.mxu0 0.0
    %55 = vmatprep.subr.mxu0 0.0
    %56 = vmatpush1.msra.mxu0 0.0
    %57 = vmatprep.subr.mxu0 0.0
    %58 = vmatpush1.msra.mxu0 0.0
    %59 = vmatprep.subr.mxu0 0.0
    %60 = vmatpush1.msra.mxu0 0.0
    %61 = vmatprep.subr.mxu0 0.0
    %62 = vmatpush1.msra.mxu0 0.0
    %63 = vmatprep.subr.mxu0 0.0
    %64 = vmatpush1.msra.mxu0 0.0
    %65 = vmatprep.subr.mxu0 0.0
    %66 = vmatpush1.msra.mxu0 0.0
    %67 = vmatprep.subr.mxu0 0.0
    %68 = vmatpush1.msra.mxu0 0.0
    %69 = vmatprep.subr.mxu0 0.0
    %70 = vmatpush1.msra.mxu0 0.0
    %71 = vmatprep.subr.mxu0 0.0
    %72 = vmatpush1.msra.mxu0 0.0
    %73 = vmatprep.subr.mxu0 0.0
    %74 = vmatpush1.msra.mxu0 0.0
    %75 = vmatprep.subr.mxu0 0.0
    %76 = vmatpush1.msra.mxu0 0.0
    %77 = vmatprep.subr.mxu0 0.0
    %78 = vmatpush1.msra.mxu0 0.0
    %79 = vmatprep.subr.mxu0 0.0
    %80 = vmatpush1.msra.mxu0 0.0
    %81 = vmatprep.subr.mxu0 0.0
    %82 = vmatpush1.msra.mxu0 0.0
    %83 = vmatprep.subr.mxu0 0.0
    %84 = vmatpush1.msra.mxu0 0.0
    %85 = vmatprep.subr.mxu0 0.0
    %86 = vmatpush1.msra.mxu0 0.0
    %87 = vmatprep.subr.mxu0 0.0
    %88 = vmatpush1.msra.mxu0 0.0
    %89 = vmatprep.subr.mxu0 0.0
    %90 = vmatpush1.msra.mxu0 0.0
    %91 = vmatprep.subr.mxu0 0.0
    %92 = vmatpush1.msra.mxu0 0.0
    %93 = vmatprep.subr.mxu0 0.0
    %94 = vmatpush1.msra.mxu0 0.0
    %95 = vmatprep.subr.mxu0 0.0
    %96 = vmatpush1.msra.mxu0 0.0
    %97 = vmatprep.subr.mxu0 0.0
    %98 = vmatpush1.msra.mxu0 0.0
    %99 = vmatprep.subr.mxu0 0.0
    %100 = vmatpush1.msra.mxu0 0.0
    %101 = vmatprep.subr.mxu0 0.0
    %102 = vmatpush1.msra.mxu0 0.0
    %103 = vmatprep.mubr.f32.mxu0 0.0
    %104 = vmatmul.mubr.f32.gmra.mrb[0].mxu0 %v34
    %v105 = vpop.f32.mrb[0].mxu0
    %v106 = vadd.f32 0.0, %v105
    %v107 = vpop.f32.mrb[0].mxu0
    %v108 = vadd.f32 0.0, %v107
    %109 = vmatprep.mubr.f32.mxu0 0.0
    %110 = vmatmul.mubr.f32.gmra.mrb[0].mxu0 %v37
    %v111 = vpop.f32.mrb[0].mxu0
    %v112 = vadd.f32 0.0, %v111
    %v113 = vpop.f32.mrb[0].mxu0
    %v114 = vadd.f32 0.0, %v113
    %115 = vdwg.mxu0
    %v116 = vxor.u32 %v106, 2147483648
    %v117 = vxor.u32 %v112, 2147483648
    %v118 = vmul.f32 %v116, 1.442695
    %v119 = vpow.pop %v118
    %v120 = vmul.f32 %v117, 1.442695
    %v121 = vpow.pop %v120
    %v122 = vadd.f32 %v119, 1.0
    %v123 = vadd.f32 %v121, 1.0
    %v124 = vrcp.pop %v122
    %v125 = vmul.f32 1.0, %v124
    %v126 = vrcp.pop %v123
    %v127 = vmul.f32 1.0, %v126
    %v128 = vmul.f32 %v106, %v125
    %v129 = vmul.f32 %v112, %v127
    %v130 = vmul.f32 %v128, %v108
    %v131 = vmul.f32 %v129, %v114
    %v132 = vld [vmem:[#allocation2] sm:$0xff]
    %v133 = vld [vmem:[#allocation2 + $0x8] sm:$0xff]
    %v134 = vld [vmem:[%s2] sm:$0xff]
    %v135 = vld [vmem:[%s2 + $0x8] sm:$0xff]
    %v136 = vld [vmem:[%s2 + $0x10] sm:$0xff]
    %v137 = vld [vmem:[%s2 + $0x18] sm:$0xff]
    %v138 = vld [vmem:[%s2 + $0x20] sm:$0xff]
    %v139 = vld [vmem:[%s2 + $0x28] sm:$0xff]
    %v140 = vld [vmem:[%s2 + $0x30] sm:$0xff]
    %v141 = vld [vmem:[%s2 + $0x38] sm:$0xff]
    %v142 = vld [vmem:[%s2 + $0x40] sm:$0xff]
    %v143 = vld [vmem:[%s2 + $0x48] sm:$0xff]
    %v144 = vld [vmem:[%s2 + $0x50] sm:$0xff]
    %v145 = vld [vmem:[%s2 + $0x58] sm:$0xff]
    %v146 = vld [vmem:[%s2 + $0x60] sm:$0xff]
    %v147 = vld [vmem:[%s2 + $0x68] sm:$0xff]
    %v148 = vld [vmem:[%s2 + $0x70] sm:$0xff]
    %v149 = vld [vmem:[%s2 + $0x78] sm:$0xff]
    %150 = vmatprep.subr.mxu0 0.0
    %151 = vmatpush1.msra.mxu0 %v134
    %152 = vmatprep.subr.mxu0 0.0
    %153 = vmatpush1.msra.mxu0 %v135
    %154 = vmatprep.subr.mxu0 0.0
    %155 = vmatpush1.msra.mxu0 %v136
    %156 = vmatprep.subr.mxu0 0.0
    %157 = vmatpush1.msra.mxu0 %v137
    %158 = vmatprep.subr.mxu0 0.0
    %159 = vmatpush1.msra.mxu0 %v138
    %160 = vmatprep.subr.mxu0 0.0
    %161 = vmatpush1.msra.mxu0 %v139
    %162 = vmatprep.subr.mxu0 0.0
    %163 = vmatpush1.msra.mxu0 %v140
    %164 = vmatprep.subr.mxu0 0.0
    %165 = vmatpush1.msra.mxu0 %v141
    %166 = vmatprep.subr.mxu0 0.0
    %167 = vmatpush1.msra.mxu0 %v142
    %168 = vmatprep.subr.mxu0 0.0
    %169 = vmatpush1.msra.mxu0 %v143
    %170 = vmatprep.subr.mxu0 0.0
    %171 = vmatpush1.msra.mxu0 %v144
    %172 = vmatprep.subr.mxu0 0.0
    %173 = vmatpush1.msra.mxu0 %v145
    %174 = vmatprep.subr.mxu0 0.0
    %175 = vmatpush1.msra.mxu0 %v146
    %176 = vmatprep.subr.mxu0 0.0
    %177 = vmatpush1.msra.mxu0 %v147
    %178 = vmatprep.subr.mxu0 0.0
    %179 = vmatpush1.msra.mxu0 %v148
    %180 = vmatprep.subr.mxu0 0.0
    %181 = vmatpush1.msra.mxu0 %v149
    %182 = vmatprep.subr.mxu0 0.0
    %183 = vmatpush1.msra.mxu0 0.0
    %184 = vmatprep.subr.mxu0 0.0
    %185 = vmatpush1.msra.mxu0 0.0
    %186 = vmatprep.subr.mxu0 0.0
    %187 = vmatpush1.msra.mxu0 0.0
    %188 = vmatprep.subr.mxu0 0.0
    %189 = vmatpush1.msra.mxu0 0.0
    %190 = vmatprep.subr.mxu0 0.0
    %191 = vmatpush1.msra.mxu0 0.0
    %192 = vmatprep.subr.mxu0 0.0
    %193 = vmatpush1.msra.mxu0 0.0
    %194 = vmatprep.subr.mxu0 0.0
    %195 = vmatpush1.msra.mxu0 0.0
    %196 = vmatprep.subr.mxu0 0.0
    %197 = vmatpush1.msra.mxu0 0.0
    %198 = vmatprep.subr.mxu0 0.0
    %199 = vmatpush1.msra.mxu0 0.0
    %200 = vmatprep.subr.mxu0 0.0
    %201 = vmatpush1.msra.mxu0 0.0
    %202 = vmatprep.subr.mxu0 0.0
    %203 = vmatpush1.msra.mxu0 0.0
    %204 = vmatprep.subr.mxu0 0.0
    %205 = vmatpush1.msra.mxu0 0.0
    %206 = vmatprep.subr.mxu0 0.0
    %207 = vmatpush1.msra.mxu0 0.0
    %208 = vmatprep.subr.mxu0 0.0
    %209 = vmatpush1.msra.mxu0 0.0
    %210 = vmatprep.subr.mxu0 0.0
    %211 = vmatpush1.msra.mxu0 0.0
    %212 = vmatprep.subr.mxu0 0.0
    %213 = vmatpush1.msra.mxu0 0.0
    %214 = vmatprep.mubr.f32.mxu0 0.0
    %215 = vmatmul.mubr.f32.gmra.mrb[0].mxu0 %v130
    %v216 = vpop.f32.mrb[0].mxu0
    %v217 = vadd.f32 0.0, %v216
    %v218 = vpop.f32.mrb[0].mxu0
    %219 = vmatprep.mubr.f32.mxu0 0.0
    %220 = vmatmul.mubr.f32.gmra.mrb[0].mxu0 %v131
    %v221 = vpop.f32.mrb[0].mxu0
    %v222 = vadd.f32 0.0, %v221
    %v223 = vpop.f32.mrb[0].mxu0
    %224 = vdwg.mxu0
    %v225 = vadd.f32 %v132, %v217
    %v226 = vadd.f32 %v133, %v222
    %227 = vst.msk [vmem:[#allocation2] sm:$0xff] %vm32, %v225
    %228 = vst.msk [vmem:[#allocation2 + $0x8] sm:$0xff] %vm32, %v226
    // Predicated region
    $region18: #{mlp_pallas_fused.1} parent=1 // pred_check
      _
    $region19: #{mlp_pallas_fused.1} parent=1 // pred_check_branch
      %230 = sbr.rel (0) target = $region21
    $region20: #{mlp_pallas_fused.1} parent=1 // pred_region
      %s232 = ssub.s32 256, 256
      %233 = vsyncadd [#allocation3], %s232
      %s234 = sshll.u32 [#allocation2], 4
      %s235 = int_to_ptr.vmem [resolvable:$true] %s234
      %240 = dma.vmem_to_hbm [thread:$0]  %s235, 256, %s3, [#allocation3], 128, 128, 8
    $region21: #{mlp_pallas_fused.1} parent=1 // pred_fallthru
      _
    // Predicated region
    $region22: #{mlp_pallas_fused.1} parent=1 // pred_check
      _
    $region23: #{mlp_pallas_fused.1} parent=1 // pred_check_branch
      %242 = sbr.rel (0) target = $region25
    $region24: #{mlp_pallas_fused.1} parent=1 // pred_region
      %243 = dma.done [#allocation3], 256
    $region25: #{mlp_pallas_fused.1} parent=1 // pred_fallthru
      _
    %244 = vsyncpa [#allocation3], 1

</llo_original>
